<compile_context>
chip_gen: v7x
topology: tpu7x:2x2x1
jax: 0.10.0
libtpu: 0.0.40
codegen_flags: <defaults>
</compile_context>

<pallas_src>
import functools

import jax
import jax.numpy as jnp
from jax.experimental import pallas as pl
from jax.experimental.pallas import tpu as pltpu


def _round_up(x, m):
    return (x + m - 1) // m * m


def _cdiv(a, b):
    return -(-a // b)


# ------------------------------ kernels -------------------------------------


def _linear_kernel_acc(x_ref, w_ref, b_ref, o_ref, acc_ref, *, compute_dtype):
    """K split across grid axis 2: f32 accumulator, bias/cast epilogue at last k."""
    k = pl.program_id(2)

    @pl.when(k == 0)
    def _init():
        acc_ref[...] = jnp.zeros_like(acc_ref)

    # Cast the x tile to the MXU compute dtype in-kernel (no-op when already f32).
    acc_ref[...] += jnp.dot(
        x_ref[...].astype(compute_dtype),
        w_ref[...],
        preferred_element_type=jnp.float32,
    )

    @pl.when(k == pl.num_programs(2) - 1)
    def _finalize():
        o_ref[...] = (acc_ref[...] + b_ref[...]).astype(o_ref.dtype)


def _linear_kernel_single_k(x_ref, w_ref, b_ref, o_ref, *, compute_dtype):
    """K fits in one block: no accumulator scratch, write the output directly."""
    o_ref[...] = (
        jnp.dot(
            x_ref[...].astype(compute_dtype),
            w_ref[...],
            preferred_element_type=jnp.float32,
        )
        + b_ref[...]
    ).astype(o_ref.dtype)


# ------------------------------ wrapper --------------------------------------


def prepare_params(weight, bias, compute_dtype=jnp.bfloat16):
    """Cast the (hidden, output) weight to the MXU compute dtype ONCE, outside
    the hot path (store the result persistently). Bias is kept in f32 for the
    epilogue add."""
    return weight.astype(compute_dtype), bias.astype(jnp.float32)


def _vmem_capacity_bytes():
    try:
        return int(pltpu.get_tpu_info().vmem_capacity_bytes)
    except Exception:
        return 64 * 1024 * 1024  # conservative (v7x per-TensorCore)


def linear_pred(x, weight, bias, *, tm=None, tn=None, tk=None):
    """y = x @ weight + bias.

    x:      (batch, hidden)   any float dtype; cast to weight dtype in-kernel.
    weight: (hidden, output)  bf16 recommended (see prepare_params); f32 works.
    bias:   (output,)         added in f32.
    """
    M, K = x.shape
    K2, N = weight.shape
    assert K == K2, "hidden dim mismatch"
    assert bias.shape == (N,)
    out_dtype = x.dtype
    compute_dtype = weight.dtype  # MXU operand dtype (bf16 for peak)

    x_isz = jnp.dtype(x.dtype).itemsize
    w_isz = jnp.dtype(weight.dtype).itemsize
    o_isz = jnp.dtype(out_dtype).itemsize
    m_align = 16 if x_isz == 2 else 8  # bf16 packs 2 rows / sublane

    Mp_full = _round_up(M, m_align)
    Kp_full = _round_up(K, 128)
    Np_full = _round_up(N, 128)

    vmem_cap = _vmem_capacity_bytes()
    vmem_budget = max(int(vmem_cap * 0.4), 24 * 1024 * 1024)

    # --- tile selection: tm = full M (W read once), large tk/tn -------------
    if tm is None:
        tm = min(1024, Mp_full)
    else:
        tm = min(_round_up(tm, m_align), Mp_full)
    if tk is None:
        tk = min(1024 if vmem_cap >= 96 * 1024 * 1024 else 512, Kp_full)
    else:
        tk = min(_round_up(tk, 128), Kp_full)
    if tn is None:
        tn = min(512, Np_full)
    else:
        tn = min(_round_up(tn, 128), Np_full)

    def vmem_need(tm_, tk_, tn_):
        # double-buffered x, W, bias, out blocks + f32 accumulator (conservative)
        return (
            2 * (tm_ * tk_ * x_isz + tk_ * tn_ * w_isz + tn_ * 4 + tm_ * tn_ * o_isz)
            + tm_ * tn_ * 4
        )

    # Shrink tiles until they fit the per-generation VMEM budget (v7x: 64 MiB).
    while vmem_need(tm, tk, tn) > vmem_budget:
        if tk > 256:
            tk = _round_up(tk // 2, 128)
        elif tn > 256:
            tn = _round_up(tn // 2, 128)
        elif tm > 256:
            tm = max(m_align, _round_up(tm // 2, m_align))
        elif tk > 128:
            tk = 128
        elif tn > 128:
            tn = 128
        elif tm > m_align:
            tm = max(m_align, _round_up(tm // 2, m_align))
        else:
            break

    # --- ensure >= 2 blocks along a parallel axis (v7x has 2 TensorCores) ----
    if _cdiv(M, tm) * _cdiv(N, tn) == 1:
        if Np_full >= 256:
            half = Np_full // 2
            tn = half if half % 128 == 0 else 128  # never adds lane padding
        elif Mp_full >= 2 * m_align:
            tm = max(m_align, _round_up(Mp_full // 2, m_align))

    Mp = _round_up(M, tm)
    Kp = _round_up(K, tk)
    Np = _round_up(N, tn)
    grid = (Mp // tm, Np // tn, Kp // tk)
    grid_m, grid_n, grid_k = grid

    # --- pad only when needed (aligned shapes skip the HBM roundtrip) --------
    xp = x if (Mp == M and Kp == K) else jnp.pad(x, ((0, Mp - M), (0, Kp - K)))
    wp = (
        weight
        if (Kp == K and Np == N)
        else jnp.pad(weight, ((0, Kp - K), (0, Np - N)))
    )
    b_f32 = bias.astype(jnp.float32)
    bp = (b_f32 if Np == N else jnp.pad(b_f32, (0, Np - N))).reshape(1, Np)

    # --- kernel variant ------------------------------------------------------
    if grid_k == 1:
        kernel = functools.partial(_linear_kernel_single_k, compute_dtype=compute_dtype)
        scratch_shapes = []
    else:
        kernel = functools.partial(_linear_kernel_acc, compute_dtype=compute_dtype)
        scratch_shapes = [pltpu.VMEM((tm, tn), jnp.float32)]

    flops = 2 * M * N * K
    bytes_accessed = (
        Mp * Kp * x_isz * grid_n      # x re-read once per N block
        + Kp * Np * w_isz * grid_m    # W re-read once per M block (== once if tm=Mp)
        + Np * 4 * grid_m
        + Mp * Np * o_isz
    )

    need = vmem_need(tm, tk, tn)
    vmem_limit = int(min(max(2 * need, 32 * 1024 * 1024), int(vmem_cap * 0.7)))

    out_p = pl.pallas_call(
        kernel,
        out_shape=jax.ShapeDtypeStruct((Mp, Np), out_dtype),
        grid=grid,
        in_specs=[
            pl.BlockSpec((tm, tk), lambda i, j, k: (i, k)),
            # TODO(synk): add pipeline_mode=pl.Buffered(3) here if profiling
            # shows exposed weight DMA and VMEM headroom allows (careful on v7x).
            pl.BlockSpec((tk, tn), lambda i, j, k: (k, j)),
            pl.BlockSpec((1, tn), lambda i, j, k: (0, j)),
        ],
        out_specs=pl.BlockSpec((tm, tn), lambda i, j, k: (i, j)),
        scratch_shapes=scratch_shapes,
        compiler_params=pltpu.CompilerParams(
            dimension_semantics=("parallel", "parallel", "arbitrary"),
            vmem_limit_bytes=vmem_limit,
        ),
        cost_estimate=pl.CostEstimate(
            flops=flops, transcendentals=0, bytes_accessed=bytes_accessed
        ),
    )(xp, wp, bp)

    if Mp == M and Np == N:
        return out_p
    return out_p[:M, :N]


# ------------------------------ tests ----------------------------------------

if __name__ == "__main__":
    key = jax.random.PRNGKey(0)
    kx, kw, kb, kx2, kw2, kb2 = jax.random.split(key, 6)

    # --- Small case matching the module's toy shapes -------------------------
    batch_size, hidden_size, output_size = 8, 32, 16
    x = jax.random.normal(kx, (batch_size, hidden_size), dtype=jnp.float32)
    # torch stores weight as (output, hidden); we keep the transposed layout.
    weight = jax.random.normal(kw, (hidden_size, output_size), dtype=jnp.float32) * 0.1
    bias = jax.random.normal(kb, (output_size,), dtype=jnp.float32) * 0.1
    ref = x @ weight + bias

    # (a) f32 weights: exact check (single-k path, no accumulator scratch).
    out_f32 = linear_pred(x, weight, bias)
    jax.block_until_ready(out_f32)
    assert out_f32.shape == (batch_size, output_size)
    assert jnp.allclose(out_f32, ref, atol=1e-5, rtol=1e-5)

    # (b) primary path: weight stored persistently in bf16, x cast in-kernel.
    w_bf16, b_prep = prepare_params(weight, bias)
    out_bf16 = linear_pred(x, w_bf16, b_prep)
    jax.block_until_ready(out_bf16)
    assert jnp.allclose(out_bf16, ref, atol=5e-2, rtol=5e-2)

    # --- Larger case: multi-block N (2-TC parallel split) + K accumulation ---
    M2, K2d, N2 = 384, 512, 384
    x2 = jax.random.normal(kx2, (M2, K2d), dtype=jnp.float32)
    w2 = jax.random.normal(kw2, (K2d, N2), dtype=jnp.float32) * 0.05
    b2 = jax.random.normal(kb2, (N2,), dtype=jnp.float32) * 0.05
    ref2 = x2 @ w2 + b2

    out2_f32 = linear_pred(x2, w2, b2, tk=256)  # grid_k == 2 -> accumulator path
    jax.block_until_ready(out2_f32)
    assert out2_f32.shape == (M2, N2)
    assert jnp.allclose(out2_f32, ref2, atol=1e-3, rtol=1e-3)

    w2_bf16, b2_prep = prepare_params(w2, b2)
    out2_bf16 = linear_pred(x2, w2_bf16, b2_prep, tk=256)
    jax.block_until_ready(out2_bf16)
    assert jnp.allclose(out2_bf16, ref2, atol=5e-2, rtol=5e-2)

    print("KERNEL_OK")
</pallas_src>

<mosaic_0001>
module attributes {stable_mosaic.version = 11 : i64} {
  func.func @_linear_kernel_single_k(%arg0: i32, %arg1: i32, %arg2: i32, %arg3: memref<8x128xf32, #tpu.memory_space<vmem>>, %arg4: memref<128x128xf32, #tpu.memory_space<vmem>>, %arg5: memref<1x128xf32, #tpu.memory_space<vmem>>, %arg6: memref<8x128xf32, #tpu.memory_space<vmem>>) attributes {dimension_semantics = [#tpu.dimension_semantics<parallel>, #tpu.dimension_semantics<parallel>, #tpu.dimension_semantics<arbitrary>], iteration_bounds = array<i64: 1, 1, 1>, scalar_prefetch = 0 : i64, scratch_operands = 0 : i64, tpu.core_type = #tpu.core_type<tc>, window_params = [{transform_indices = @transform_0, window_bounds = array<i64: 8, 128>}, {transform_indices = @transform_1, window_bounds = array<i64: 128, 128>}, {transform_indices = @transform_2, window_bounds = array<i64: 1, 128>}, {transform_indices = @transform_3, window_bounds = array<i64: 8, 128>}]} {
    %c0 = arith.constant 0 : index
    %c0_0 = arith.constant 0 : index
    %0 = vector.load %arg3[%c0, %c0_0] : memref<8x128xf32, #tpu.memory_space<vmem>>, vector<8x128xf32>
    %c0_1 = arith.constant 0 : index
    %c0_2 = arith.constant 0 : index
    %1 = vector.load %arg4[%c0_1, %c0_2] : memref<128x128xf32, #tpu.memory_space<vmem>>, vector<128x128xf32>
    %cst = arith.constant dense<0.000000e+00> : vector<8x128xf32>
    %2 = tpu.matmul %0, %1, %cst {dimension_numbers = #tpu.dot_dimension_numbers<[1], [0], [0], [1], [0, 0, 1, 1], [], []>} : vector<8x128xf32>, vector<128x128xf32>, vector<8x128xf32> -> vector<8x128xf32>
    %c0_3 = arith.constant 0 : index
    %c0_4 = arith.constant 0 : index
    %3 = vector.load %arg5[%c0_3, %c0_4] : memref<1x128xf32, #tpu.memory_space<vmem>>, vector<1x128xf32>
    %4 = vector.broadcast %3 : vector<1x128xf32> to vector<8x128xf32>
    %5 = arith.addf %2, %4 : vector<8x128xf32>
    %c0_5 = arith.constant 0 : index
    %c0_6 = arith.constant 0 : index
    %6 = vector.load %arg6[%c0_5, %c0_6] : memref<8x128xf32, #tpu.memory_space<vmem>>, vector<8x128xf32>
    tpu.vector_store %arg6[%c0_5, %c0_6], %5 {strides = array<i32>} : memref<8x128xf32, #tpu.memory_space<vmem>>, vector<8x128xf32>,
    return
  }
  func.func @transform_0(%arg0: i32, %arg1: i32, %arg2: i32) -> (i32, i32) {
    %c0_i32 = arith.constant 0 : i32
    return %arg0, %arg2 : i32, i32
  }
  func.func @transform_1(%arg0: i32, %arg1: i32, %arg2: i32) -> (i32, i32) {
    %c0_i32 = arith.constant 0 : i32
    return %arg2, %arg1 : i32, i32
  }
  func.func @transform_2(%arg0: i32, %arg1: i32, %arg2: i32) -> (i32, i32) {
    %c0_i32 = arith.constant 0 : i32
    %c0_i32_0 = arith.constant 0 : i32
    return %c0_i32, %arg1 : i32, i32
  }
  func.func @transform_3(%arg0: i32, %arg1: i32, %arg2: i32) -> (i32, i32) {
    %c0_i32 = arith.constant 0 : i32
    return %arg0, %arg1 : i32, i32
  }
}

</mosaic_0001>

<llo_original>
// kernel: tpu_custom_call.1
$region0: #{tpu_custom_call.1}
  #allocation0 [shape = 'u32[]', space=smem, size = 0x4, offset = 0x4, fixed_abs, tag = 'smem constant byte address 0x4 - core index']
  #allocation1 [shape = 'u32[144,128]{1,0:T(1,128)}', space=vmem, size = 0x12000, scoped, tag = 'internal scratch']
  %s0 = inlined_call_operand.hbm [shape: f32[8,128], index: 0, kind: input, shape index: {}]
  %s1 = inlined_call_operand.hbm [shape: f32[128,128], index: 1, kind: input, shape index: {}]
  %s2 = inlined_call_operand.vmem [shape: f32[1,128], index: 2, kind: input, shape index: {}]
  %s3 = inlined_call_operand.hbm [shape: f32[8,128], index: 3, kind: output, shape index: {}]
  %s4 = sld [smem:[#allocation0]]
  $region30: #{tpu_custom_call.1} parent=0
    _
  %s6 = ssub.s32 1, %s4
  %s7 = scalar_select 0, %s6, %s4
  $region1: #{tpu_custom_call.1} parent=0
    #allocation2 [shape = 'u8[4096]{0}', space=vmem, size = 0x1000, scoped, tag = 'input window, operand 0, single buffered']
    #allocation3 [shape = 's32[1]{0}', space=sflag, size = 0x4, scoped, tag = 'scoped memory for tpu_custom_call.1']
    #allocation4 [shape = 's32[1]{0}', space=sflag, size = 0x4, scoped, tag = 'scoped memory for tpu_custom_call.1']
    #allocation5 [shape = 'u8[65536]{0}', space=vmem, size = 0x10000, scoped, tag = 'input window, operand 1, single buffered']
    #allocation6 [shape = 's32[1]{0}', space=sflag, size = 0x4, scoped, tag = 'scoped memory for tpu_custom_call.1']
    #allocation7 [shape = 'u8[4096]{0}', space=vmem, size = 0x1000, scoped, tag = 'output window, operand 0, single buffered']
    %8 = vsyncpa [#allocation3], 0
    %9 = vsyncpa [#allocation6], 0
    %10 = vsyncpa [#allocation4], 0
    // Predicated region
    $region2: #{tpu_custom_call.1} parent=1 // pred_check
      _
    $region3: #{tpu_custom_call.1} parent=1 // pred_check_branch
      %12 = sbr.rel (0) target = $region5
    $region4: #{tpu_custom_call.1} parent=1 // pred_region
      %s14 = ssub.s32 128, 128
      %15 = vsyncadd [#allocation3], %s14
      %s17 = sshll.u32 [#allocation2], 4
      %s18 = int_to_ptr.vmem [resolvable:$true] %s17
      %20 = dma.hbm_to_vmem [thread:$0]  %s0, 128, %s18, [#allocation3]
    $region5: #{tpu_custom_call.1} parent=1 // pred_fallthru
      _
    // Predicated region
    $region6: #{tpu_custom_call.1} parent=1 // pred_check
      _
    $region7: #{tpu_custom_call.1} parent=1 // pred_check_branch
      %22 = sbr.rel (0) target = $region9
    $region8: #{tpu_custom_call.1} parent=1 // pred_region
      %s24 = ssub.s32 2048, 2048
      %25 = vsyncadd [#allocation6], %s24
      %s26 = sshll.u32 [#allocation5], 4
      %s27 = int_to_ptr.vmem [resolvable:$true] %s26
      %32 = dma.hbm_to_vmem [thread:$0]  %s1, 2048, %s27, [#allocation6], 128, 128, 8
    $region9: #{tpu_custom_call.1} parent=1 // pred_fallthru
      _
    // Predicated region
    $region10: #{tpu_custom_call.1} parent=1 // pred_check
      _
    $region11: #{tpu_custom_call.1} parent=1 // pred_check_branch
      %34 = sbr.rel (0) target = $region13
    $region12: #{tpu_custom_call.1} parent=1 // pred_region
      _
    $region13: #{tpu_custom_call.1} parent=1 // pred_fallthru
      _
    // Predicated region
    $region14: #{tpu_custom_call.1} parent=1 // pred_check
      _
    $region15: #{tpu_custom_call.1} parent=1 // pred_check_branch
      %36 = sbr.rel (0) target = $region17
    $region16: #{tpu_custom_call.1} parent=1 // pred_region
      %37 = dma.done [#allocation3], 128
    $region17: #{tpu_custom_call.1} parent=1 // pred_fallthru
      _
    // Predicated region
    $region18: #{tpu_custom_call.1} parent=1 // pred_check
      _
    $region19: #{tpu_custom_call.1} parent=1 // pred_check_branch
      %39 = sbr.rel (0) target = $region21
    $region20: #{tpu_custom_call.1} parent=1 // pred_region
      %40 = dma.done [#allocation6], 2048
    $region21: #{tpu_custom_call.1} parent=1 // pred_fallthru
      _
    %v41 = vld [vmem:[#allocation2] sm:$0xff]
    %v42 = vld [vmem:[#allocation5] sm:$0xff]
    %v43 = vld [vmem:[#allocation5 + $0x8] sm:$0xff]
    %v44 = vld [vmem:[#allocation5 + $0x10] sm:$0xff]
    %v45 = vld [vmem:[#allocation5 + $0x18] sm:$0xff]
    %v46 = vld [vmem:[#allocation5 + $0x20] sm:$0xff]
    %v47 = vld [vmem:[#allocation5 + $0x28] sm:$0xff]
    %v48 = vld [vmem:[#allocation5 + $0x30] sm:$0xff]
    %v49 = vld [vmem:[#allocation5 + $0x38] sm:$0xff]
    %v50 = vld [vmem:[#allocation5 + $0x40] sm:$0xff]
    %v51 = vld [vmem:[#allocation5 + $0x48] sm:$0xff]
    %v52 = vld [vmem:[#allocation5 + $0x50] sm:$0xff]
    %v53 = vld [vmem:[#allocation5 + $0x58] sm:$0xff]
    %v54 = vld [vmem:[#allocation5 + $0x60] sm:$0xff]
    %v55 = vld [vmem:[#allocation5 + $0x68] sm:$0xff]
    %v56 = vld [vmem:[#allocation5 + $0x70] sm:$0xff]
    %v57 = vld [vmem:[#allocation5 + $0x78] sm:$0xff]
    %v58 = vld [vmem:[%s2] sm:$0x1]
    %v60 = vlaneseq
    %v61 = vshrl.u32 %v60, 7
    %v62 = vsub.s32 0, %v61
    %v63 = vrot.slane %v58, %v62
    %65 = vmatprep.subr.mxu0 0.0
    %66 = vmatpush1.msra.mxu0 %v42
    %67 = vmatprep.subr.mxu0 0.0
    %68 = vmatpush1.msra.mxu0 %v43
    %69 = vmatprep.subr.mxu0 0.0
    %70 = vmatpush1.msra.mxu0 %v44
    %71 = vmatprep.subr.mxu0 0.0
    %72 = vmatpush1.msra.mxu0 %v45
    %73 = vmatprep.subr.mxu0 0.0
    %74 = vmatpush1.msra.mxu0 %v46
    %75 = vmatprep.subr.mxu0 0.0
    %76 = vmatpush1.msra.mxu0 %v47
    %77 = vmatprep.subr.mxu0 0.0
    %78 = vmatpush1.msra.mxu0 %v48
    %79 = vmatprep.subr.mxu0 0.0
    %80 = vmatpush1.msra.mxu0 %v49
    %81 = vmatprep.subr.mxu0 0.0
    %82 = vmatpush1.msra.mxu0 %v50
    %83 = vmatprep.subr.mxu0 0.0
    %84 = vmatpush1.msra.mxu0 %v51
    %85 = vmatprep.subr.mxu0 0.0
    %86 = vmatpush1.msra.mxu0 %v52
    %87 = vmatprep.subr.mxu0 0.0
    %88 = vmatpush1.msra.mxu0 %v53
    %89 = vmatprep.subr.mxu0 0.0
    %90 = vmatpush1.msra.mxu0 %v54
    %91 = vmatprep.subr.mxu0 0.0
    %92 = vmatpush1.msra.mxu0 %v55
    %93 = vmatprep.subr.mxu0 0.0
    %94 = vmatpush1.msra.mxu0 %v56
    %95 = vmatprep.subr.mxu0 0.0
    %96 = vmatpush1.msra.mxu0 %v57
    %97 = vmatprep.subr.mxu0 0.0
    %98 = vmatpush1.msra.mxu0 0.0
    %99 = vmatprep.subr.mxu0 0.0
    %100 = vmatpush1.msra.mxu0 0.0
    %101 = vmatprep.subr.mxu0 0.0
    %102 = vmatpush1.msra.mxu0 0.0
    %103 = vmatprep.subr.mxu0 0.0
    %104 = vmatpush1.msra.mxu0 0.0
    %105 = vmatprep.subr.mxu0 0.0
    %106 = vmatpush1.msra.mxu0 0.0
    %107 = vmatprep.subr.mxu0 0.0
    %108 = vmatpush1.msra.mxu0 0.0
    %109 = vmatprep.subr.mxu0 0.0
    %110 = vmatpush1.msra.mxu0 0.0
    %111 = vmatprep.subr.mxu0 0.0
    %112 = vmatpush1.msra.mxu0 0.0
    %113 = vmatprep.subr.mxu0 0.0
    %114 = vmatpush1.msra.mxu0 0.0
    %115 = vmatprep.subr.mxu0 0.0
    %116 = vmatpush1.msra.mxu0 0.0
    %117 = vmatprep.subr.mxu0 0.0
    %118 = vmatpush1.msra.mxu0 0.0
    %119 = vmatprep.subr.mxu0 0.0
    %120 = vmatpush1.msra.mxu0 0.0
    %121 = vmatprep.subr.mxu0 0.0
    %122 = vmatpush1.msra.mxu0 0.0
    %123 = vmatprep.subr.mxu0 0.0
    %124 = vmatpush1.msra.mxu0 0.0
    %125 = vmatprep.subr.mxu0 0.0
    %126 = vmatpush1.msra.mxu0 0.0
    %127 = vmatprep.subr.mxu0 0.0
    %128 = vmatpush1.msra.mxu0 0.0
    %129 = vmatprep.mubr.f32.mxu0 0.0
    %130 = vmatmul.mubr.f32.gmra.mrb[0].mxu0 %v41
    %v131 = vpop.f32.mrb[0].mxu0
    %v132 = vadd.f32 %v63, %v131
    %v133 = vpop.f32.mrb[0].mxu0
    %134 = vdwg.mxu0
    %135 = vst [vmem:[#allocation7] sm:$0xff] %v132
    // Predicated region
    $region22: #{tpu_custom_call.1} parent=1 // pred_check
      _
    $region23: #{tpu_custom_call.1} parent=1 // pred_check_branch
      %137 = sbr.rel (0) target = $region25
    $region24: #{tpu_custom_call.1} parent=1 // pred_region
      %s139 = ssub.s32 128, 128
      %140 = vsyncadd [#allocation4], %s139
      %s142 = sshll.u32 [#allocation7], 4
      %s143 = int_to_ptr.vmem [resolvable:$true] %s142
      %145 = dma.vmem_to_hbm [thread:$0]  %s143, 128, %s3, [#allocation4]
    $region25: #{tpu_custom_call.1} parent=1 // pred_fallthru
      _
    // Predicated region
    $region26: #{tpu_custom_call.1} parent=1 // pred_check
      _
    $region27: #{tpu_custom_call.1} parent=1 // pred_check_branch
      %147 = sbr.rel (0) target = $region29
    $region28: #{tpu_custom_call.1} parent=1 // pred_region
      %148 = dma.done [#allocation4], 128
    $region29: #{tpu_custom_call.1} parent=1 // pred_fallthru
      _
    %149 = vsyncpa [#allocation3], 1
    %150 = vsyncpa [#allocation6], 1
    %151 = vsyncpa [#allocation4], 1

</llo_original>
